<compile_context>
chip_gen: v7x
topology: tpu7x:2x2x1
jax: 0.10.0
libtpu: 0.0.40
codegen_flags: <defaults>
</compile_context>

<pallas_src>
import functools

import jax
import jax.numpy as jnp
from jax.experimental import pallas as pl
from jax.experimental.pallas import tpu as pltpu

EPS = 1e-5

_TILE_BYTES_LO = 2 * 1024 * 1024   # ~roofline-sized x tile (>=85% of HBM BW)
_TILE_BYTES_HI = 8 * 1024 * 1024   # diminishing returns beyond this


# ---------------------------------------------------------------------------
# Kernels
# ---------------------------------------------------------------------------

def _layernorm_kernel(*refs, has_bias):
    """Standard path: (block_rows, D) tile, reduce over the lane (last) axis."""
    if has_bias:
        x_ref, w_ref, b_ref, o_ref = refs
    else:
        x_ref, w_ref, o_ref = refs
        b_ref = None
    x = x_ref[...].astype(jnp.float32)
    # One-pass stats (E[x^2] - mean^2) keep live f32 temporaries to ~2 per
    # element (vs 3 for the two-pass form) so the VMEM budget buys larger row
    # tiles. Accumulation is f32; the clamp guards the rare catastrophic-
    # cancellation case when |mean| >> std.
    mean = jnp.mean(x, axis=-1, keepdims=True)
    msq = jnp.mean(x * x, axis=-1, keepdims=True)
    var = jnp.maximum(msq - mean * mean, 0.0)
    inv = jax.lax.rsqrt(var + EPS)
    y = (x - mean) * inv * w_ref[...]
    if b_ref is not None:
        y = y + b_ref[...]
    o_ref[...] = y.astype(o_ref.dtype)


def _layernorm_packed_kernel(*refs, has_bias, k, d):
    """Lane-dense path for narrow D: k rows folded into the 128-lane axis.

    x_ref is (block_rows, C) with C = k*d = 128, so every output store is a
    full-width vst (no masked vst.msk partial stores). Per-row statistics are
    exact f32 segmented (masked) lane reductions; k is a small trace-time
    constant so the loop fully unrolls.
    """
    if has_bias:
        x_ref, w_ref, b_ref, o_ref = refs
    else:
        x_ref, w_ref, o_ref = refs
        b_ref = None
    x = x_ref[...].astype(jnp.float32)              # (br, C), C = k*d
    lane = jax.lax.broadcasted_iota(jnp.int32, x.shape, 1)
    inv_d = 1.0 / d
    y = jnp.zeros(x.shape, jnp.float32)
    for j in range(k):                               # unrolled, k <= 16
        m = jnp.logical_and(lane >= j * d, lane < (j + 1) * d)
        xj = jnp.where(m, x, 0.0)
        mean = jnp.sum(xj, axis=-1, keepdims=True) * inv_d      # (br, 1)
        msq = jnp.sum(xj * xj, axis=-1, keepdims=True) * inv_d
        inv = jax.lax.rsqrt(jnp.maximum(msq - mean * mean, 0.0) + EPS)
        y = y + jnp.where(m, (x - mean) * inv, 0.0)
    y = y * w_ref[...]
    if b_ref is not None:
        y = y + b_ref[...]
    o_ref[...] = y.astype(o_ref.dtype)


# ---------------------------------------------------------------------------
# Tiling policy
# ---------------------------------------------------------------------------

def _round_up(n, m):
    return ((n + m - 1) // m) * m


def _sublane_packing(dtype):
    # Rows per packed sublane tile: f32 -> 8, bf16/f16 -> 16, int8/fp8 -> 32.
    return {4: 8, 2: 16, 1: 32}[jnp.dtype(dtype).itemsize]


def _vmem_budgets():
    """Generation-aware VMEM budgets (v5e/v6e: 128 MiB, v7x: 64 MiB per TC)."""
    try:
        cap = int(pltpu.get_tpu_info().vmem_capacity_bytes)
    except Exception:
        cap = 64 * 1024 * 1024   # conservative (v7x per-TC) fallback
    pipeline_budget = cap // 2                                   # tiles + dbl buf
    vmem_limit = min((cap * 3) // 4, max(cap - 20 * 1024 * 1024, cap // 2))
    return pipeline_budget, vmem_limit


def _auto_block_rows(rows, width, itemsize, packing, pipeline_budget, temp_bytes):
    """Row-tile size: as big as the VMEM budget allows, capped in bytes (not a
    fixed row count), with enough grid steps to keep prefetch(i+1)/compute(i)/
    writeback(i-1) overlapped and (best effort) an even grid for v7x's 2 TCs."""
    if rows <= packing:
        return rows
    row_in_bytes = width * itemsize
    # Live bytes per row: double-buffered in + out tiles plus f32 temporaries.
    per_row = width * (4 * itemsize + temp_bytes)
    br = max(packing, (pipeline_budget // per_row) // packing * packing)
    # Byte cap on the x tile: 8 MiB is well past the ~85%-of-roofline knee.
    br = min(br, max(packing, (_TILE_BYTES_HI // row_in_bytes) // packing * packing))
    # Aim for >= ~8 grid steps (>= 3-4 per TensorCore on 2-TC v7x) ...
    steps_cap = max(packing, _round_up(pl.cdiv(rows, 8), packing))
    # ... but never shrink the tile below ~2 MiB where per-step overhead
    # (~0.35 us) starts eating HBM roofline.
    br_lo = min(br, max(packing, (_TILE_BYTES_LO // row_in_bytes) // packing * packing))
    br = max(br_lo, min(br, steps_cap))
    # Never exceed the row count (only the global last block is ragged).
    br = min(br, rows - rows % packing)
    # v7x nudge: prefer an even grid length so both TensorCores get equal work.
    # Single attempt; only ever shrinks the tile, so it is VMEM-safe.
    grid_len = pl.cdiv(rows, br)
    if grid_len > 1 and grid_len % 2 == 1:
        alt = max(packing, _round_up(pl.cdiv(rows, grid_len + 1), packing))
        if pl.cdiv(rows, alt) % 2 == 0:
            br = alt
    return br


# ---------------------------------------------------------------------------
# Wrapper
# ---------------------------------------------------------------------------

@functools.partial(jax.jit, static_argnames=("block_rows",))
def layer_norm_pallas(x, weight, bias=None, *, block_rows=None):
    """LayerNorm over the last dim of x with eps=1e-5.

    x: (..., D); weight: (D,); bias: (D,) or None.
    """
    orig_shape = x.shape
    D = orig_shape[-1]
    rows = 1
    for s in orig_shape[:-1]:
        rows *= s

    has_bias = bias is not None
    itemsize = jnp.dtype(x.dtype).itemsize
    packing = _sublane_packing(x.dtype)
    pipeline_budget, vmem_limit = _vmem_budgets()

    # Cast params to f32 once here (not per grid step inside the kernel).
    w_f32 = weight.astype(jnp.float32)
    b_f32 = bias.astype(jnp.float32) if has_bias else None

    # Lane-dense repack for narrow feature dims: fold k = 128/D rows into the
    # 128-lane axis so output stores are full-width vst (no masked partial
    # stores) — the biggest measured store-path lever for D < 128.
    packed = (rows > 0 and 8 <= D < 128 and 128 % D == 0
              and rows % (128 // D) == 0)
    # TODO(synk): D % 128 != 0 with D >= 128 (or rows not divisible by k) still
    # takes the masked-store path; a general repack needs row padding.

    if packed:
        k = 128 // D
        width = 128
        rows_eff = rows // k
        x2 = x.reshape(rows_eff, width)
        w2 = jnp.tile(w_f32, k).reshape(1, width)
        b2 = jnp.tile(b_f32, k).reshape(1, width) if has_bias else None
        kernel = functools.partial(_layernorm_packed_kernel,
                                   has_bias=has_bias, k=k, d=D)
        temp_bytes = 16   # x_f32, y accumulator, masked/product temporaries
    else:
        width = D
        rows_eff = rows
        x2 = x.reshape(rows_eff, width)
        w2 = w_f32.reshape(1, width)
        b2 = b_f32.reshape(1, width) if has_bias else None
        kernel = functools.partial(_layernorm_kernel, has_bias=has_bias)
        temp_bytes = 8    # x_f32 + one elementwise temp (one-pass stats)

    if block_rows is None:
        br = _auto_block_rows(rows_eff, width, itemsize, packing,
                              pipeline_budget, temp_bytes)
    else:
        br = max(packing, _round_up(int(block_rows), packing))
        br = min(br, _round_up(rows_eff, packing))

    # Grid over row tiles; the ragged last block (if any) is masked by Pallas —
    # per-row reductions mean padding rows can never corrupt valid rows.
    grid = (pl.cdiv(rows_eff, br),)

    in_specs = [
        pl.BlockSpec((br, width), lambda i: (i, 0)),
        # Grid-invariant index_map: Pallas fetches the param block once and
        # re-uses it across all grid steps (no per-step DMA).
        pl.BlockSpec((1, width), lambda i: (0, 0)),
    ]
    args = [x2, w2]
    if has_bias:
        in_specs.append(pl.BlockSpec((1, width), lambda i: (0, 0)))
        args.append(b2)

    cost = pl.CostEstimate(
        flops=int((11 if packed else 7) * rows * D),
        transcendentals=int(rows),
        bytes_accessed=int(rows * D * 2 * itemsize
                           + D * 4 * (2 if has_bias else 1)),
    )

    out = pl.pallas_call(
        kernel,
        out_shape=jax.ShapeDtypeStruct((rows_eff, width), x.dtype),
        grid_spec=pltpu.PrefetchScalarGridSpec(
            num_scalar_prefetch=0,
            grid=grid,
            in_specs=in_specs,
            out_specs=pl.BlockSpec((br, width), lambda i: (i, 0)),
        ),
        compiler_params=pltpu.CompilerParams(
            dimension_semantics=("parallel",),
            vmem_limit_bytes=int(vmem_limit),
        ),
        cost_estimate=cost,
    )(*args)

    return out.reshape(orig_shape)


# ---------------------------------------------------------------------------
# Reference + demo
# ---------------------------------------------------------------------------

def _reference_layer_norm(x, weight, bias):
    xf = x.astype(jnp.float32)
    mean = jnp.mean(xf, axis=-1, keepdims=True)
    var = jnp.mean((xf - mean) ** 2, axis=-1, keepdims=True)
    y = (xf - mean) / jnp.sqrt(var + EPS)
    y = y * weight.astype(jnp.float32)
    if bias is not None:
        y = y + bias.astype(jnp.float32)
    return y.astype(x.dtype)


if __name__ == "__main__":
    key = jax.random.PRNGKey(0)
    k1, k2 = jax.random.split(key)

    # Shapes implied by the module: input (..., ndim). Small demo: (2, 8, 32).
    B, S, D = 2, 8, 32
    x = jax.random.normal(k1, (B, S, D), dtype=jnp.float32)
    # Module init is ones/zeros; use nearby non-trivial deterministic values so
    # the affine (scale/shift) path is actually exercised.
    weight = 1.0 + 0.05 * jnp.arange(D, dtype=jnp.float32) / D
    bias = 0.02 * jnp.arange(D, dtype=jnp.float32) / D - 0.01

    # bias=True (lane-dense packed path, D=32 < 128)
    out = jax.block_until_ready(layer_norm_pallas(x, weight, bias))
    ref = _reference_layer_norm(x, weight, bias)
    assert jnp.allclose(out, ref, atol=2e-5, rtol=2e-5), "bias=True mismatch"

    # bias=False (module's optional-bias path)
    out_nb = jax.block_until_ready(layer_norm_pallas(x, weight, None))
    ref_nb = _reference_layer_norm(x, weight, None)
    assert jnp.allclose(out_nb, ref_nb, atol=2e-5, rtol=2e-5), "bias=False mismatch"

    # Standard (lane-aligned) path sanity check, D multiple of 128.
    D2 = 256
    x2 = jax.random.normal(k2, (B, S, D2), dtype=jnp.float32)
    w2 = 1.0 + 0.05 * jnp.arange(D2, dtype=jnp.float32) / D2
    b2 = 0.02 * jnp.arange(D2, dtype=jnp.float32) / D2 - 0.01
    out2 = jax.block_until_ready(layer_norm_pallas(x2, w2, b2))
    ref2 = _reference_layer_norm(x2, w2, b2)
    assert jnp.allclose(out2, ref2, atol=2e-5, rtol=2e-5), "standard path mismatch"

    print("KERNEL_OK")
</pallas_src>

<mosaic_0001>
module attributes {stable_mosaic.version = 11 : i64} {
  func.func @_layernorm_packed_kernel(%arg0: i32, %arg1: memref<4x128xf32, #tpu.memory_space<vmem>>, %arg2: memref<1x128xf32, #tpu.memory_space<vmem>>, %arg3: memref<1x128xf32, #tpu.memory_space<vmem>>, %arg4: memref<4x128xf32, #tpu.memory_space<vmem>>) attributes {dimension_semantics = [#tpu.dimension_semantics<parallel>], iteration_bounds = array<i64: 1>, scalar_prefetch = 0 : i64, scratch_operands = 0 : i64, tpu.core_type = #tpu.core_type<tc>, window_params = [{transform_indices = @transform_0, window_bounds = array<i64: 4, 128>}, {pipeline_mode = #tpu.pipeline_mode<synchronous>, transform_indices = @transform_1, window_bounds = array<i64: 1, 128>}, {pipeline_mode = #tpu.pipeline_mode<synchronous>, transform_indices = @transform_2, window_bounds = array<i64: 1, 128>}, {transform_indices = @transform_3, window_bounds = array<i64: 4, 128>}]} {
    %c0 = arith.constant 0 : index
    %c0_0 = arith.constant 0 : index
    %0 = vector.load %arg1[%c0, %c0_0] : memref<4x128xf32, #tpu.memory_space<vmem>>, vector<4x128xf32>
    %1 = tpu.iota {dimensions = array<i32: 1>} : vector<4x128xi32>
    %cst = arith.constant 0.000000e+00 : f32
    %2 = vector.broadcast %cst : f32 to vector<4x128xf32>
    %c0_i32 = arith.constant 0 : i32
    %3 = vector.broadcast %c0_i32 : i32 to vector<4x128xi32>
    %4 = arith.cmpi sge, %1, %3 : vector<4x128xi32>
    %c32_i32 = arith.constant 32 : i32
    %5 = vector.broadcast %c32_i32 : i32 to vector<4x128xi32>
    %6 = arith.cmpi slt, %1, %5 : vector<4x128xi32>
    %7 = arith.andi %4, %6 : vector<4x128xi1>
    %cst_1 = arith.constant 0.000000e+00 : f32
    %8 = vector.broadcast %cst_1 : f32 to vector<4x128xf32>
    %9 = arith.select %7, %0, %8 : vector<4x128xi1>, vector<4x128xf32>
    %cst_2 = arith.constant dense<0.000000e+00> : vector<4xf32>
    %10 = vector.multi_reduction <add>, %9, %cst_2 [1] : vector<4x128xf32> to vector<4xf32>
    %11 = vector.shape_cast %10 : vector<4xf32> to vector<4x1xf32>
    %cst_3 = arith.constant 3.125000e-02 : f32
    %12 = vector.broadcast %cst_3 : f32 to vector<4x1xf32>
    %13 = arith.mulf %11, %12 : vector<4x1xf32>
    %14 = arith.mulf %9, %9 : vector<4x128xf32>
    %cst_4 = arith.constant dense<0.000000e+00> : vector<4xf32>
    %15 = vector.multi_reduction <add>, %14, %cst_4 [1] : vector<4x128xf32> to vector<4xf32>
    %16 = vector.shape_cast %15 : vector<4xf32> to vector<4x1xf32>
    %cst_5 = arith.constant 3.125000e-02 : f32
    %17 = vector.broadcast %cst_5 : f32 to vector<4x1xf32>
    %18 = arith.mulf %16, %17 : vector<4x1xf32>
    %19 = arith.mulf %13, %13 : vector<4x1xf32>
    %20 = arith.subf %18, %19 : vector<4x1xf32>
    %cst_6 = arith.constant 0.000000e+00 : f32
    %21 = vector.broadcast %cst_6 : f32 to vector<4x1xf32>
    %22 = arith.maximumf %20, %21 : vector<4x1xf32>
    %cst_7 = arith.constant 9.99999974E-6 : f32
    %23 = vector.broadcast %cst_7 : f32 to vector<4x1xf32>
    %24 = arith.addf %22, %23 : vector<4x1xf32>
    %25 = math.rsqrt %24 : vector<4x1xf32>
    %26 = vector.broadcast %13 : vector<4x1xf32> to vector<4x128xf32>
    %27 = arith.subf %0, %26 : vector<4x128xf32>
    %28 = vector.broadcast %25 : vector<4x1xf32> to vector<4x128xf32>
    %29 = arith.mulf %27, %28 : vector<4x128xf32>
    %cst_8 = arith.constant 0.000000e+00 : f32
    %30 = vector.broadcast %cst_8 : f32 to vector<4x128xf32>
    %31 = arith.select %7, %29, %30 : vector<4x128xi1>, vector<4x128xf32>
    %32 = arith.addf %2, %31 : vector<4x128xf32>
    %c32_i32_9 = arith.constant 32 : i32
    %33 = vector.broadcast %c32_i32_9 : i32 to vector<4x128xi32>
    %34 = arith.cmpi sge, %1, %33 : vector<4x128xi32>
    %c64_i32 = arith.constant 64 : i32
    %35 = vector.broadcast %c64_i32 : i32 to vector<4x128xi32>
    %36 = arith.cmpi slt, %1, %35 : vector<4x128xi32>
    %37 = arith.andi %34, %36 : vector<4x128xi1>
    %cst_10 = arith.constant 0.000000e+00 : f32
    %38 = vector.broadcast %cst_10 : f32 to vector<4x128xf32>
    %39 = arith.select %37, %0, %38 : vector<4x128xi1>, vector<4x128xf32>
    %cst_11 = arith.constant dense<0.000000e+00> : vector<4xf32>
    %40 = vector.multi_reduction <add>, %39, %cst_11 [1] : vector<4x128xf32> to vector<4xf32>
    %41 = vector.shape_cast %40 : vector<4xf32> to vector<4x1xf32>
    %cst_12 = arith.constant 3.125000e-02 : f32
    %42 = vector.broadcast %cst_12 : f32 to vector<4x1xf32>
    %43 = arith.mulf %41, %42 : vector<4x1xf32>
    %44 = arith.mulf %39, %39 : vector<4x128xf32>
    %cst_13 = arith.constant dense<0.000000e+00> : vector<4xf32>
    %45 = vector.multi_reduction <add>, %44, %cst_13 [1] : vector<4x128xf32> to vector<4xf32>
    %46 = vector.shape_cast %45 : vector<4xf32> to vector<4x1xf32>
    %cst_14 = arith.constant 3.125000e-02 : f32
    %47 = vector.broadcast %cst_14 : f32 to vector<4x1xf32>
    %48 = arith.mulf %46, %47 : vector<4x1xf32>
    %49 = arith.mulf %43, %43 : vector<4x1xf32>
    %50 = arith.subf %48, %49 : vector<4x1xf32>
    %cst_15 = arith.constant 0.000000e+00 : f32
    %51 = vector.broadcast %cst_15 : f32 to vector<4x1xf32>
    %52 = arith.maximumf %50, %51 : vector<4x1xf32>
    %cst_16 = arith.constant 9.99999974E-6 : f32
    %53 = vector.broadcast %cst_16 : f32 to vector<4x1xf32>
    %54 = arith.addf %52, %53 : vector<4x1xf32>
    %55 = math.rsqrt %54 : vector<4x1xf32>
    %56 = vector.broadcast %43 : vector<4x1xf32> to vector<4x128xf32>
    %57 = arith.subf %0, %56 : vector<4x128xf32>
    %58 = vector.broadcast %55 : vector<4x1xf32> to vector<4x128xf32>
    %59 = arith.mulf %57, %58 : vector<4x128xf32>
    %cst_17 = arith.constant 0.000000e+00 : f32
    %60 = vector.broadcast %cst_17 : f32 to vector<4x128xf32>
    %61 = arith.select %37, %59, %60 : vector<4x128xi1>, vector<4x128xf32>
    %62 = arith.addf %32, %61 : vector<4x128xf32>
    %c64_i32_18 = arith.constant 64 : i32
    %63 = vector.broadcast %c64_i32_18 : i32 to vector<4x128xi32>
    %64 = arith.cmpi sge, %1, %63 : vector<4x128xi32>
    %c96_i32 = arith.constant 96 : i32
    %65 = vector.broadcast %c96_i32 : i32 to vector<4x128xi32>
    %66 = arith.cmpi slt, %1, %65 : vector<4x128xi32>
    %67 = arith.andi %64, %66 : vector<4x128xi1>
    %cst_19 = arith.constant 0.000000e+00 : f32
    %68 = vector.broadcast %cst_19 : f32 to vector<4x128xf32>
    %69 = arith.select %67, %0, %68 : vector<4x128xi1>, vector<4x128xf32>
    %cst_20 = arith.constant dense<0.000000e+00> : vector<4xf32>
    %70 = vector.multi_reduction <add>, %69, %cst_20 [1] : vector<4x128xf32> to vector<4xf32>
    %71 = vector.shape_cast %70 : vector<4xf32> to vector<4x1xf32>
    %cst_21 = arith.constant 3.125000e-02 : f32
    %72 = vector.broadcast %cst_21 : f32 to vector<4x1xf32>
    %73 = arith.mulf %71, %72 : vector<4x1xf32>
    %74 = arith.mulf %69, %69 : vector<4x128xf32>
    %cst_22 = arith.constant dense<0.000000e+00> : vector<4xf32>
    %75 = vector.multi_reduction <add>, %74, %cst_22 [1] : vector<4x128xf32> to vector<4xf32>
    %76 = vector.shape_cast %75 : vector<4xf32> to vector<4x1xf32>
    %cst_23 = arith.constant 3.125000e-02 : f32
    %77 = vector.broadcast %cst_23 : f32 to vector<4x1xf32>
    %78 = arith.mulf %76, %77 : vector<4x1xf32>
    %79 = arith.mulf %73, %73 : vector<4x1xf32>
    %80 = arith.subf %78, %79 : vector<4x1xf32>
    %cst_24 = arith.constant 0.000000e+00 : f32
    %81 = vector.broadcast %cst_24 : f32 to vector<4x1xf32>
    %82 = arith.maximumf %80, %81 : vector<4x1xf32>
    %cst_25 = arith.constant 9.99999974E-6 : f32
    %83 = vector.broadcast %cst_25 : f32 to vector<4x1xf32>
    %84 = arith.addf %82, %83 : vector<4x1xf32>
    %85 = math.rsqrt %84 : vector<4x1xf32>
    %86 = vector.broadcast %73 : vector<4x1xf32> to vector<4x128xf32>
    %87 = arith.subf %0, %86 : vector<4x128xf32>
    %88 = vector.broadcast %85 : vector<4x1xf32> to vector<4x128xf32>
    %89 = arith.mulf %87, %88 : vector<4x128xf32>
    %cst_26 = arith.constant 0.000000e+00 : f32
    %90 = vector.broadcast %cst_26 : f32 to vector<4x128xf32>
    %91 = arith.select %67, %89, %90 : vector<4x128xi1>, vector<4x128xf32>
    %92 = arith.addf %62, %91 : vector<4x128xf32>
    %c96_i32_27 = arith.constant 96 : i32
    %93 = vector.broadcast %c96_i32_27 : i32 to vector<4x128xi32>
    %94 = arith.cmpi sge, %1, %93 : vector<4x128xi32>
    %c128_i32 = arith.constant 128 : i32
    %95 = vector.broadcast %c128_i32 : i32 to vector<4x128xi32>
    %96 = arith.cmpi slt, %1, %95 : vector<4x128xi32>
    %97 = arith.andi %94, %96 : vector<4x128xi1>
    %cst_28 = arith.constant 0.000000e+00 : f32
    %98 = vector.broadcast %cst_28 : f32 to vector<4x128xf32>
    %99 = arith.select %97, %0, %98 : vector<4x128xi1>, vector<4x128xf32>
    %cst_29 = arith.constant dense<0.000000e+00> : vector<4xf32>
    %100 = vector.multi_reduction <add>, %99, %cst_29 [1] : vector<4x128xf32> to vector<4xf32>
    %101 = vector.shape_cast %100 : vector<4xf32> to vector<4x1xf32>
    %cst_30 = arith.constant 3.125000e-02 : f32
    %102 = vector.broadcast %cst_30 : f32 to vector<4x1xf32>
    %103 = arith.mulf %101, %102 : vector<4x1xf32>
    %104 = arith.mulf %99, %99 : vector<4x128xf32>
    %cst_31 = arith.constant dense<0.000000e+00> : vector<4xf32>
    %105 = vector.multi_reduction <add>, %104, %cst_31 [1] : vector<4x128xf32> to vector<4xf32>
    %106 = vector.shape_cast %105 : vector<4xf32> to vector<4x1xf32>
    %cst_32 = arith.constant 3.125000e-02 : f32
    %107 = vector.broadcast %cst_32 : f32 to vector<4x1xf32>
    %108 = arith.mulf %106, %107 : vector<4x1xf32>
    %109 = arith.mulf %103, %103 : vector<4x1xf32>
    %110 = arith.subf %108, %109 : vector<4x1xf32>
    %cst_33 = arith.constant 0.000000e+00 : f32
    %111 = vector.broadcast %cst_33 : f32 to vector<4x1xf32>
    %112 = arith.maximumf %110, %111 : vector<4x1xf32>
    %cst_34 = arith.constant 9.99999974E-6 : f32
    %113 = vector.broadcast %cst_34 : f32 to vector<4x1xf32>
    %114 = arith.addf %112, %113 : vector<4x1xf32>
    %115 = math.rsqrt %114 : vector<4x1xf32>
    %116 = vector.broadcast %103 : vector<4x1xf32> to vector<4x128xf32>
    %117 = arith.subf %0, %116 : vector<4x128xf32>
    %118 = vector.broadcast %115 : vector<4x1xf32> to vector<4x128xf32>
    %119 = arith.mulf %117, %118 : vector<4x128xf32>
    %cst_35 = arith.constant 0.000000e+00 : f32
    %120 = vector.broadcast %cst_35 : f32 to vector<4x128xf32>
    %121 = arith.select %97, %119, %120 : vector<4x128xi1>, vector<4x128xf32>
    %122 = arith.addf %92, %121 : vector<4x128xf32>
    %c0_36 = arith.constant 0 : index
    %c0_37 = arith.constant 0 : index
    %123 = vector.load %arg2[%c0_36, %c0_37] : memref<1x128xf32, #tpu.memory_space<vmem>>, vector<1x128xf32>
    %124 = vector.broadcast %123 : vector<1x128xf32> to vector<4x128xf32>
    %125 = arith.mulf %122, %124 : vector<4x128xf32>
    %c0_38 = arith.constant 0 : index
    %c0_39 = arith.constant 0 : index
    %126 = vector.load %arg3[%c0_38, %c0_39] : memref<1x128xf32, #tpu.memory_space<vmem>>, vector<1x128xf32>
    %127 = vector.broadcast %126 : vector<1x128xf32> to vector<4x128xf32>
    %128 = arith.addf %125, %127 : vector<4x128xf32>
    %c0_40 = arith.constant 0 : index
    %c0_41 = arith.constant 0 : index
    %129 = vector.load %arg4[%c0_40, %c0_41] : memref<4x128xf32, #tpu.memory_space<vmem>>, vector<4x128xf32>
    tpu.vector_store %arg4[%c0_40, %c0_41], %128 {strides = array<i32>} : memref<4x128xf32, #tpu.memory_space<vmem>>, vector<4x128xf32>,
    return
  }
  func.func @transform_0(%arg0: i32) -> (i32, i32) {
    %c0_i32 = arith.constant 0 : i32
    %c0_i32_0 = arith.constant 0 : i32
    return %arg0, %c0_i32 : i32, i32
  }
  func.func @transform_1(%arg0: i32) -> (i32, i32) {
    %c0_i32 = arith.constant 0 : i32
    %c0_i32_0 = arith.constant 0 : i32
    %c0_i32_1 = arith.constant 0 : i32
    return %c0_i32, %c0_i32_0 : i32, i32
  }
  func.func @transform_2(%arg0: i32) -> (i32, i32) {
    %c0_i32 = arith.constant 0 : i32
    %c0_i32_0 = arith.constant 0 : i32
    %c0_i32_1 = arith.constant 0 : i32
    return %c0_i32, %c0_i32_0 : i32, i32
  }
  func.func @transform_3(%arg0: i32) -> (i32, i32) {
    %c0_i32 = arith.constant 0 : i32
    %c0_i32_0 = arith.constant 0 : i32
    return %arg0, %c0_i32 : i32, i32
  }
}

</mosaic_0001>

<llo_original>
// kernel: tile.14
$region0: #{tile.14}
  %s0 = inlined_call_operand.vmem [shape: f32[4,32], index: 0, kind: input, shape index: {}]
  %s1 = inlined_call_operand.vmem [shape: f32[1,128], index: 1, kind: output, shape index: {}]
  $region1: #{tile.14} parent=0
    #allocation0 [shape = 'u8[4096]{0}', space=vmem, size = 0x1000, scoped, tag = 'scoped mem for output reshape']
    #allocation1 [shape = 'u8[4096]{0}', space=vmem, size = 0x1000, scoped, tag = 'scoped mem for input reshape']
    %s3 = sshllo.u32 0, 4
    %v4 = vld [vmem:[%s0] sm:%s3]
    %5 = vst [vmem:[#allocation1] sm:%s3] %v4
    %v6 = vld [vmem:[#allocation1] sm:$0x1]
    %vm7 = vcmask 261120
    %8 = vst.msk [vmem:[#allocation0] sm:$0x1] %vm7, %v6
    %s9 = scalar_lea.vmem [#allocation1], 3
    %v10 = vld [vmem:[%s9] sm:$0x1]
    %11 = vrot.lane.b32.xlu0 %v10, 96
    %v12 = vpop.permute.xlu0 %11
    %vm13 = vcmask 1048320
    %14 = vst.msk [vmem:[#allocation0] sm:$0x1] %vm13, %v12
    %s15 = scalar_lea.vmem [#allocation1], 2
    %v16 = vld [vmem:[%s15] sm:$0x1]
    %17 = vrot.lane.b32.xlu0 %v16, 64
    %v18 = vpop.permute.xlu0 %17
    %vm19 = vcmask 785920
    %20 = vst.msk [vmem:[#allocation0] sm:$0x1] %vm19, %v18
    %s21 = scalar_lea.vmem [#allocation1], 1
    %v22 = vld [vmem:[%s21] sm:$0x1]
    %23 = vrot.lane.b32.xlu0 %v22, 32
    %v24 = vpop.permute.xlu0 %23
    %vm25 = vcmask 523520
    %26 = vst.msk [vmem:[#allocation0] sm:$0x1] %vm25, %v24
    %s28 = sshllo.u32 0, 1
    %v30 = vld [vmem:[#allocation0] sm:%s28]
    %s31 = sshllo.u32 0, 1
    %32 = vst [vmem:[%s1] sm:%s31] %v30

// kernel: tile.13
$region0: #{tile.13}
  #allocation0 [shape = 's32[1]{0}', space=sflag, size = 0x4, scoped, tag = 'scoped memory for tile.13']
  %s0 = inlined_call_operand.vmem [shape: f32[32], index: 0, kind: input, shape index: {}]
  %s1 = inlined_call_operand.vmem [shape: f32[4,32], index: 1, kind: output, shape index: {}]
  // Predicated region
  $region2: #{tile.13} parent=0 // pred_check
    _
  $region3: #{tile.13} parent=0 // pred_check_branch
    %3 = sbr.rel (0) target = $region5
  $region4: #{tile.13} parent=0 // pred_region
    _
  $region5: #{tile.13} parent=0 // pred_fallthru
    _
  %v4 = vld [vmem:[%s0] ss:$0 sm:$0xff]
  %5 = vst [vmem:[%s1] sm:$0xf] %v4

// kernel: layer_norm_pallas.1
$region0: #{layer_norm_pallas.1}
  #allocation0 [shape = 'u32[]', space=smem, size = 0x4, offset = 0x4, fixed_abs, tag = 'smem constant byte address 0x4 - core index']
  #allocation1 [shape = 'u32[144,128]{1,0:T(1,128)}', space=vmem, size = 0x12000, scoped, tag = 'internal scratch']
  %s0 = inlined_call_operand.vmem [shape: f32[4,128], index: 0, kind: input, shape index: {}]
  %s1 = inlined_call_operand.vmem [shape: f32[1,128], index: 1, kind: input, shape index: {}]
  %s2 = inlined_call_operand.vmem [shape: f32[1,128], index: 2, kind: input, shape index: {}]
  %s3 = inlined_call_operand.vmem [shape: f32[4,128], index: 3, kind: output, shape index: {}]
  %s4 = sld [smem:[#allocation0]]
  $region22: #{layer_norm_pallas.1} parent=0
    _
  %s6 = ssub.s32 1, %s4
  %s7 = scalar_select 0, %s6, %s4
  // Predicated region
  $region2: #{layer_norm_pallas.1} parent=0 // pred_check
    _
  $region3: #{layer_norm_pallas.1} parent=0 // pred_check_branch
    %9 = sbr.rel (0) target = $region5
  $region4: #{layer_norm_pallas.1} parent=0 // pred_region
    _
  $region5: #{layer_norm_pallas.1} parent=0 // pred_fallthru
    _
  // Predicated region
  $region6: #{layer_norm_pallas.1} parent=0 // pred_check
    _
  $region7: #{layer_norm_pallas.1} parent=0 // pred_check_branch
    %11 = sbr.rel (0) target = $region9
  $region8: #{layer_norm_pallas.1} parent=0 // pred_region
    _
  $region9: #{layer_norm_pallas.1} parent=0 // pred_fallthru
    _
  // Predicated region
  $region10: #{layer_norm_pallas.1} parent=0 // pred_check
    _
  $region11: #{layer_norm_pallas.1} parent=0 // pred_check_branch
    %13 = sbr.rel (0) target = $region13
  $region12: #{layer_norm_pallas.1} parent=0 // pred_region
    _
  $region13: #{layer_norm_pallas.1} parent=0 // pred_fallthru
    _
  %v14 = vld [vmem:[%s0] sm:$0xf]
  %v15 = vlaneseq
  %v16 = vand.u32 %v15, 127
  %vm17 = vcmp.ge.s32.totalorder %v16, 0
  %vm18 = vcmp.lt.s32.totalorder %v16, 32
  %vm19 = vmand %vm17, %vm18
  %v20 = vsel %vm19, %v14, 0.0
  %vm21 = vcmask 1043456
  %v22 = vsel %vm21, %v20, 0.0
  %23 = vadd.xlane.f32.xlu0 %v22
  %v24 = vpop.xlane.xlu0 %23
  %v25 = vmul.f32 %v24, 0.03125
  %v26 = vmul.f32 %v20, %v20
  %v27 = vsel %vm21, %v26, 0.0
  %28 = vadd.xlane.f32.xlu0 %v27
  %v29 = vpop.xlane.xlu0 %28
  %v30 = vmul.f32 %v29, 0.03125
  %v31 = vmul.f32 %v25, %v25
  %v32 = vsub.f32 %v30, %v31
  %v33 = vmax.f32 %v32, 0.0
  %v34 = vadd.f32 %v33, 1e-05
  %v35 = vrsqrt.pop %v34
  %v36 = vsub.f32 %v14, %v25
  %v37 = vmul.f32 %v36, %v35
  %v38 = vsel %vm19, %v37, 0.0
  %v39 = vadd.f32 %v38, 0.0
  %vm40 = vcmp.ge.s32.totalorder %v16, 32
  %vm41 = vcmp.lt.s32.totalorder %v16, 64
  %vm42 = vmand %vm40, %vm41
  %v43 = vsel %vm42, %v14, 0.0
  %v44 = vsel %vm21, %v43, 0.0
  %45 = vadd.xlane.f32.xlu0 %v44
  %v46 = vpop.xlane.xlu0 %45
  %v47 = vmul.f32 %v46, 0.03125
  %v48 = vmul.f32 %v43, %v43
  %v49 = vsel %vm21, %v48, 0.0
  %50 = vadd.xlane.f32.xlu0 %v49
  %v51 = vpop.xlane.xlu0 %50
  %v52 = vmul.f32 %v51, 0.03125
  %v53 = vmul.f32 %v47, %v47
  %v54 = vsub.f32 %v52, %v53
  %v55 = vmax.f32 %v54, 0.0
  %v56 = vadd.f32 %v55, 1e-05
  %v57 = vrsqrt.pop %v56
  %v58 = vsub.f32 %v14, %v47
  %v59 = vmul.f32 %v58, %v57
  %v60 = vsel %vm42, %v59, 0.0
  %v61 = vadd.f32 %v39, %v60
  %vm62 = vcmp.ge.s32.totalorder %v16, 64
  %vm63 = vcmp.lt.s32.totalorder %v16, 96
  %vm64 = vmand %vm62, %vm63
  %v65 = vsel %vm64, %v14, 0.0
  %v66 = vsel %vm21, %v65, 0.0
  %67 = vadd.xlane.f32.xlu0 %v66
  %v68 = vpop.xlane.xlu0 %67
  %v69 = vmul.f32 %v68, 0.03125
  %v70 = vmul.f32 %v65, %v65
  %v71 = vsel %vm21, %v70, 0.0
  %72 = vadd.xlane.f32.xlu0 %v71
  %v73 = vpop.xlane.xlu0 %72
  %v74 = vmul.f32 %v73, 0.03125
  %v75 = vmul.f32 %v69, %v69
  %v76 = vsub.f32 %v74, %v75
  %v77 = vmax.f32 %v76, 0.0
  %v78 = vadd.f32 %v77, 1e-05
  %v79 = vrsqrt.pop %v78
  %v80 = vsub.f32 %v14, %v69
  %v81 = vmul.f32 %v80, %v79
  %v82 = vsel %vm64, %v81, 0.0
  %v83 = vadd.f32 %v61, %v82
  %vm84 = vcmp.ge.s32.totalorder %v16, 96
  %vm85 = vcmp.lt.s32.totalorder %v16, 128
  %vm86 = vmand %vm84, %vm85
  %v87 = vsel %vm86, %v14, 0.0
  %v88 = vsel %vm21, %v87, 0.0
  %89 = vadd.xlane.f32.xlu0 %v88
  %v90 = vpop.xlane.xlu0 %89
  %v91 = vmul.f32 %v90, 0.03125
  %v92 = vmul.f32 %v87, %v87
  %v93 = vsel %vm21, %v92, 0.0
  %94 = vadd.xlane.f32.xlu0 %v93
  %v95 = vpop.xlane.xlu0 %94
  %v96 = vmul.f32 %v95, 0.03125
  %v97 = vmul.f32 %v91, %v91
  %v98 = vsub.f32 %v96, %v97
  %v99 = vmax.f32 %v98, 0.0
  %v100 = vadd.f32 %v99, 1e-05
  %v101 = vrsqrt.pop %v100
  %v102 = vsub.f32 %v14, %v91
  %v103 = vmul.f32 %v102, %v101
  %v104 = vsel %vm86, %v103, 0.0
  %v105 = vadd.f32 %v83, %v104
  %v106 = vld [vmem:[%s1] sm:$0x1]
  %v108 = vlaneseq
  %v109 = vshrl.u32 %v108, 7
  %v110 = vsub.s32 0, %v109
  %v111 = vrot.slane %v106, %v110
  %v113 = vmul.f32 %v105, %v111
  %v114 = vld [vmem:[%s2] sm:$0x1]
  %v116 = vlaneseq
  %v117 = vshrl.u32 %v116, 7
  %v118 = vsub.s32 0, %v117
  %v119 = vrot.slane %v114, %v118
  %v121 = vadd.f32 %v113, %v119
  %122 = vst [vmem:[%s3] sm:$0xf] %v121
  // Predicated region
  $region14: #{layer_norm_pallas.1} parent=0 // pred_check
    _
  $region15: #{layer_norm_pallas.1} parent=0 // pred_check_branch
    %124 = sbr.rel (0) target = $region17
  $region16: #{layer_norm_pallas.1} parent=0 // pred_region
    _
  $region17: #{layer_norm_pallas.1} parent=0 // pred_fallthru
    _
  // Predicated region
  $region18: #{layer_norm_pallas.1} parent=0 // pred_check
    _
  $region19: #{layer_norm_pallas.1} parent=0 // pred_check_branch
    %126 = sbr.rel (0) target = $region21
  $region20: #{layer_norm_pallas.1} parent=0 // pred_region
    _
  $region21: #{layer_norm_pallas.1} parent=0 // pred_fallthru
    _

</llo_original>
